<compile_context>
chip_gen: v7x
topology: tpu7x:2x2x1
jax: 0.10.0
libtpu: 0.0.40
codegen_flags: <defaults>
</compile_context>

<pallas_src>
import functools
import math

import jax
import jax.numpy as jnp
from jax.experimental import pallas as pl
from jax.experimental.pallas import tpu as pltpu


def _squeeze_kernel(blk_min_ref, blk_max_ref, blk_last_ref,   # scalar-prefetch (SMEM)
                    lens_ref, x_ref, o_ref, *, tT, D):
    """One (batch-block, time-tile) block of the masked truncating copy.

    blk_*_ref: SMEM (nB,) int32 -- per batch-block min/max length, last valid tile.
    lens_ref:  VMEM (bB, 1) int32 -- per-row lengths, used only on boundary tiles.
    x_ref/o_ref: VMEM (bB, tT*D) blocks of the lane-flattened embeddings.
    """
    del blk_last_ref  # only used by the input index_map
    i = pl.program_id(0)
    j = pl.program_id(1)
    t0 = j * tT
    vmin = blk_min_ref[i] - t0   # min valid steps left in this tile over block's rows
    vmax = blk_max_ref[i] - t0   # max valid steps left in this tile

    @pl.when(vmax <= 0)
    def _():
        # Fully padded tile: input DMA was skipped (index_map clamped); emit zeros.
        o_ref[...] = jnp.zeros_like(o_ref)

    @pl.when(vmin >= tT)
    def _():
        # Fully valid tile: straight copy, no mask work (fast path).
        o_ref[...] = x_ref[...]

    @pl.when(jnp.logical_and(vmax > 0, vmin < tT))
    def _():
        # Boundary tile: per-row masked copy.
        lane = jax.lax.broadcasted_iota(jnp.int32, o_ref.shape, dimension=1)
        n_valid = jnp.clip(lens_ref[...] - t0, 0, tT) * D          # (bB, 1) valid lanes
        o_ref[...] = jnp.where(lane < n_valid, x_ref[...], 0).astype(o_ref.dtype)


def squeeze_embedding(x, x_len, max_len=None, *, target_block_bytes=2 << 20):
    """Pallas equivalent of SqueezeEmbedding.forward (batch_first=True).

    x:        (B, T, D) float array
    x_len:    (B,) int array of valid lengths (1 <= x_len[b] <= T)
    max_len:  static Python int == max(x_len). Pass it explicitly to stay jittable
              and avoid a device->host sync. If None, resolved eagerly.
    returns   (B, max_len, D) with padding positions zeroed.
    """
    B, T, D = x.shape
    if max_len is None:
        # Eager-only convenience; mirrors PyTorch's dynamic truncation.
        max_len = int(jax.device_get(jnp.max(x_len)))
    max_len = int(max_len)
    assert 1 <= max_len <= T, (max_len, T)

    itemsize = jnp.dtype(x.dtype).itemsize
    sublane = max(8, 32 // itemsize)          # 8 (f32) / 16 (bf16) / 32 (int8)
    granule_t = 128 // math.gcd(D, 128)       # smallest tT such that tT*D % 128 == 0
    tT_full = pl.cdiv(max_len, granule_t) * granule_t

    # Pick (bB, tT): sublane-dense batch rows, then as many time steps as fit the
    # byte target; widen the batch dim if one block already covers the time axis.
    bB = B if B <= sublane else sublane
    tT = (target_block_bytes // (bB * D * itemsize) // granule_t) * granule_t
    tT = max(granule_t, min(int(tT), tT_full))
    if tT == tT_full and B > bB:
        rows_wanted = max(bB, int(target_block_bytes // (tT * D * itemsize)))
        bB = B if rows_wanted >= B else max(bB, (rows_wanted // sublane) * sublane)

    nB = pl.cdiv(B, bB)
    nT = pl.cdiv(max_len, tT)

    lens = x_len.astype(jnp.int32).reshape(B)
    pad_rows = nB * bB - B
    if pad_rows:
        lens_min_src = jnp.pad(lens, (0, pad_rows),
                               constant_values=jnp.iinfo(jnp.int32).max)
        lens_max_src = jnp.pad(lens, (0, pad_rows), constant_values=0)
    else:
        lens_min_src = lens_max_src = lens
    blk_min = lens_min_src.reshape(nB, bB).min(axis=1)
    blk_max = lens_max_src.reshape(nB, bB).max(axis=1)
    blk_last = jnp.maximum(blk_max - 1, 0) // tT   # last time tile with any valid data

    lens_2d = lens.reshape(B, 1)
    x_flat = x.reshape(B, T * D)                   # free, contiguous lane-dense view

    def lens_index_map(i, j, blk_min_r, blk_max_r, blk_last_r):
        return (i, 0)

    def x_index_map(i, j, blk_min_r, blk_max_r, blk_last_r):
        # Fully padded tiles re-use the last valid tile's block index -> DMA skipped.
        return (i, jnp.minimum(j, blk_last_r[i]))

    def o_index_map(i, j, blk_min_r, blk_max_r, blk_last_r):
        return (i, j)

    kernel = functools.partial(_squeeze_kernel, tT=tT, D=D)

    out_flat = pl.pallas_call(
        kernel,
        out_shape=jax.ShapeDtypeStruct((B, max_len * D), x.dtype),
        grid_spec=pltpu.PrefetchScalarGridSpec(
            num_scalar_prefetch=3,  # blk_min, blk_max, blk_last -> SMEM
            grid=(nB, nT),
            in_specs=[pl.BlockSpec((bB, 1), lens_index_map),
                      pl.BlockSpec((bB, tT * D), x_index_map)],
            out_specs=pl.BlockSpec((bB, tT * D), o_index_map),
        ),
        compiler_params=pltpu.CompilerParams(
            dimension_semantics=("parallel", "parallel"),   # shards across v7x's 2 TCs
            vmem_limit_bytes=32 * 1024 * 1024,              # safe headroom on all gens
        ),
    )(blk_min, blk_max, blk_last, lens_2d, x_flat)

    # TODO(synk): an input_output_aliases in-place variant for max_len == T could skip
    # writes of fully-valid tiles and roughly halve HBM traffic.
    return out_flat.reshape(B, max_len, D)


if __name__ == "__main__":
    key = jax.random.PRNGKey(0)
    B, T, D = 2, 8, 32
    x = jax.random.normal(key, (B, T, D), dtype=jnp.float32)
    x_len_list = [5, 7]
    x_len = jnp.array(x_len_list, dtype=jnp.int32)
    max_len = max(x_len_list)  # static Python int -> no device->host sync

    out = jax.block_until_ready(squeeze_embedding(x, x_len, max_len))

    # Pure-JAX reference of the pack/unpack semantics.
    t_idx = jnp.arange(max_len)[None, :, None]
    ref = jnp.where(t_idx < x_len[:, None, None], x[:, :max_len, :], 0.0)

    assert out.shape == (B, max_len, D), out.shape
    assert out.dtype == x.dtype
    assert jnp.array_equal(out, ref), "mismatch vs reference (eager)"

    # Jittable path (max_len is static).
    jitted = jax.jit(squeeze_embedding, static_argnums=2)
    out_j = jax.block_until_ready(jitted(x, x_len, max_len))
    assert jnp.array_equal(out_j, ref), "mismatch vs reference (jit)"

    # Eager convenience path (max_len resolved on host).
    out_e = jax.block_until_ready(squeeze_embedding(x, x_len))
    assert jnp.array_equal(out_e, ref), "mismatch vs reference (auto max_len)"

    print("KERNEL_OK")
</pallas_src>

<mosaic_0001>
module attributes {stable_mosaic.version = 11 : i64} {
  func.func @_squeeze_kernel(%arg0: i32, %arg1: i32, %arg2: memref<1xi32, #tpu.memory_space<smem>>, %arg3: memref<1xi32, #tpu.memory_space<smem>>, %arg4: memref<1xi32, #tpu.memory_space<smem>>, %arg5: memref<2x1xi32, #tpu.memory_space<vmem>>, %arg6: memref<2x256xf32, #tpu.memory_space<vmem>>, %arg7: memref<2x256xf32, #tpu.memory_space<vmem>>) attributes {dimension_semantics = [#tpu.dimension_semantics<parallel>, #tpu.dimension_semantics<parallel>], iteration_bounds = array<i64: 1, 1>, scalar_prefetch = 3 : i64, scratch_operands = 0 : i64, tpu.core_type = #tpu.core_type<tc>, window_params = [{transform_indices = @transform_0, window_bounds = array<i64: 2, 1>}, {transform_indices = @transform_1, window_bounds = array<i64: 2, 256>}, {transform_indices = @transform_2, window_bounds = array<i64: 2, 256>}]} {
    %c8_i32 = arith.constant 8 : i32
    %0 = arith.muli %arg1, %c8_i32 : i32
    %1 = arith.index_cast %arg0 : i32 to index
    %2 = memref.load %arg2[%1] : memref<1xi32, #tpu.memory_space<smem>>
    %3 = arith.subi %2, %0 : i32
    %4 = arith.index_cast %arg0 : i32 to index
    %5 = memref.load %arg3[%4] : memref<1xi32, #tpu.memory_space<smem>>
    %6 = arith.subi %5, %0 : i32
    %c0_i32 = arith.constant 0 : i32
    %7 = arith.cmpi sle, %6, %c0_i32 : i32
    %8 = arith.extui %7 : i1 to i32
    %c0_i32_0 = arith.constant 0 : i32
    %9 = arith.cmpi ne, %8, %c0_i32_0 : i32
    scf.if %9 {
      %cst = arith.constant 0.000000e+00 : f32
      %18 = vector.broadcast %cst : f32 to vector<2x256xf32>
      %c0 = arith.constant 0 : index
      %c0_6 = arith.constant 0 : index
      %19 = vector.load %arg7[%c0, %c0_6] : memref<2x256xf32, #tpu.memory_space<vmem>>, vector<2x256xf32>
      tpu.vector_store %arg7[%c0, %c0_6], %18 {strides = array<i32>} : memref<2x256xf32, #tpu.memory_space<vmem>>, vector<2x256xf32>,
    } else {
    }
    %c8_i32_1 = arith.constant 8 : i32
    %10 = arith.cmpi sge, %3, %c8_i32_1 : i32
    %11 = arith.extui %10 : i1 to i32
    %c0_i32_2 = arith.constant 0 : i32
    %12 = arith.cmpi ne, %11, %c0_i32_2 : i32
    scf.if %12 {
      %c0 = arith.constant 0 : index
      %c0_6 = arith.constant 0 : index
      %18 = vector.load %arg6[%c0, %c0_6] : memref<2x256xf32, #tpu.memory_space<vmem>>, vector<2x256xf32>
      %c0_7 = arith.constant 0 : index
      %c0_8 = arith.constant 0 : index
      %19 = vector.load %arg7[%c0_7, %c0_8] : memref<2x256xf32, #tpu.memory_space<vmem>>, vector<2x256xf32>
      tpu.vector_store %arg7[%c0_7, %c0_8], %18 {strides = array<i32>} : memref<2x256xf32, #tpu.memory_space<vmem>>, vector<2x256xf32>,
    } else {
    }
    %c0_i32_3 = arith.constant 0 : i32
    %13 = arith.cmpi sgt, %6, %c0_i32_3 : i32
    %c8_i32_4 = arith.constant 8 : i32
    %14 = arith.cmpi slt, %3, %c8_i32_4 : i32
    %15 = arith.andi %13, %14 : i1
    %16 = arith.extui %15 : i1 to i32
    %c0_i32_5 = arith.constant 0 : i32
    %17 = arith.cmpi ne, %16, %c0_i32_5 : i32
    scf.if %17 {
      %18 = tpu.iota {dimensions = array<i32: 1>} : vector<2x256xi32>
      %c0 = arith.constant 0 : index
      %c0_6 = arith.constant 0 : index
      %19 = vector.load %arg5[%c0, %c0_6] : memref<2x1xi32, #tpu.memory_space<vmem>>, vector<2x1xi32>
      %20 = vector.broadcast %0 : i32 to vector<2x1xi32>
      %21 = arith.subi %19, %20 : vector<2x1xi32>
      %c0_i32_7 = arith.constant 0 : i32
      %c8_i32_8 = arith.constant 8 : i32
      %22 = vector.broadcast %c0_i32_7 : i32 to vector<2x1xi32>
      %23 = arith.maxsi %22, %21 : vector<2x1xi32>
      %24 = vector.broadcast %c8_i32_8 : i32 to vector<2x1xi32>
      %25 = arith.minsi %24, %23 : vector<2x1xi32>
      %c32_i32 = arith.constant 32 : i32
      %26 = vector.broadcast %c32_i32 : i32 to vector<2x1xi32>
      %27 = arith.muli %25, %26 : vector<2x1xi32>
      %28 = vector.broadcast %27 : vector<2x1xi32> to vector<2x256xi32>
      %29 = arith.cmpi slt, %18, %28 : vector<2x256xi32>
      %c0_9 = arith.constant 0 : index
      %c0_10 = arith.constant 0 : index
      %30 = vector.load %arg6[%c0_9, %c0_10] : memref<2x256xf32, #tpu.memory_space<vmem>>, vector<2x256xf32>
      %c0_i32_11 = arith.constant 0 : i32
      %31 = arith.sitofp %c0_i32_11 : i32 to f32
      %32 = vector.broadcast %31 : f32 to vector<2x256xf32>
      %33 = arith.select %29, %30, %32 : vector<2x256xi1>, vector<2x256xf32>
      %c0_12 = arith.constant 0 : index
      %c0_13 = arith.constant 0 : index
      %34 = vector.load %arg7[%c0_12, %c0_13] : memref<2x256xf32, #tpu.memory_space<vmem>>, vector<2x256xf32>
      tpu.vector_store %arg7[%c0_12, %c0_13], %33 {strides = array<i32>} : memref<2x256xf32, #tpu.memory_space<vmem>>, vector<2x256xf32>,
    } else {
    }
    return
  }
  func.func @transform_0(%arg0: i32, %arg1: i32, %arg2: memref<1xi32, #tpu.memory_space<smem>>, %arg3: memref<1xi32, #tpu.memory_space<smem>>, %arg4: memref<1xi32, #tpu.memory_space<smem>>) -> (i32, i32) {
    %c0_i32 = arith.constant 0 : i32
    %c0_i32_0 = arith.constant 0 : i32
    return %arg0, %c0_i32 : i32, i32
  }
  func.func @transform_1(%arg0: i32, %arg1: i32, %arg2: memref<1xi32, #tpu.memory_space<smem>>, %arg3: memref<1xi32, #tpu.memory_space<smem>>, %arg4: memref<1xi32, #tpu.memory_space<smem>>) -> (i32, i32) {
    %0 = arith.index_cast %arg0 : i32 to index
    %1 = memref.load %arg4[%0] : memref<1xi32, #tpu.memory_space<smem>>
    %2 = arith.minsi %arg1, %1 : i32
    %c0_i32 = arith.constant 0 : i32
    return %arg0, %2 : i32, i32
  }
  func.func @transform_2(%arg0: i32, %arg1: i32, %arg2: memref<1xi32, #tpu.memory_space<smem>>, %arg3: memref<1xi32, #tpu.memory_space<smem>>, %arg4: memref<1xi32, #tpu.memory_space<smem>>) -> (i32, i32) {
    %c0_i32 = arith.constant 0 : i32
    return %arg0, %arg1 : i32, i32
  }
}

</mosaic_0001>

<llo_original>
// kernel: tpu_custom_call.1
$region0: #{tpu_custom_call.1}
  #allocation0 [shape = 'u32[]', space=smem, size = 0x4, offset = 0x4, fixed_abs, tag = 'smem constant byte address 0x4 - core index']
  #allocation1 [shape = 'u32[144,128]{1,0:T(1,128)}', space=vmem, size = 0x12000, scoped, tag = 'internal scratch']
  #allocation2 [shape = 's32[1]{0}', space=sflag, size = 0x4, scoped, tag = 'scoped memory for tpu_custom_call.1']
  #allocation3 [shape = 's32[1]{0:T(128)S(6)}', space=smem, size = 0x200, scoped, tag = 'prefetched SMEM operand 0']
  #allocation4 [shape = 's32[1]{0:T(128)S(6)}', space=smem, size = 0x200, scoped, tag = 'prefetched SMEM operand 1']
  #allocation5 [shape = 's32[1]{0:T(128)S(6)}', space=smem, size = 0x200, scoped, tag = 'prefetched SMEM operand 2']
  %s0 = inlined_call_operand.<no memory space> [shape: s32[1], index: 0, kind: input, shape index: {}]
  %s1 = inlined_call_operand.<no memory space> [shape: s32[1], index: 1, kind: input, shape index: {}]
  %s2 = inlined_call_operand.<no memory space> [shape: s32[1], index: 2, kind: input, shape index: {}]
  %s3 = inlined_call_operand.vmem [shape: s32[2,1], index: 3, kind: input, shape index: {}]
  %s4 = inlined_call_operand.vmem [shape: f32[2,256], index: 4, kind: input, shape index: {}]
  %s5 = inlined_call_operand.hbm [shape: f32[2,224], index: 5, kind: output, shape index: {}]
  %s6 = sld [smem:[#allocation0]]
  $region30: #{tpu_custom_call.1} parent=0
    _
  %s8 = ssub.s32 1, %s6
  %s9 = scalar_select 0, %s8, %s6
  %10 = sst [smem:[#allocation3]] %s0
  %11 = sst [smem:[#allocation4]] %s1
  %12 = sst [smem:[#allocation5]] %s2
  $region1: #{tpu_custom_call.1} parent=0
    #allocation6 [shape = 'u8[2048]{0}', space=vmem, size = 0x800, scoped, tag = 'output window, operand 0, single buffered']
    #allocation7 [shape = 's32[1]{0}', space=sflag, size = 0x4, scoped, tag = 'scoped memory for tpu_custom_call.1']
    %13 = vsyncpa [#allocation7], 0
    // Predicated region
    $region2: #{tpu_custom_call.1} parent=1 // pred_check
      _
    $region3: #{tpu_custom_call.1} parent=1 // pred_check_branch
      %15 = sbr.rel (0) target = $region5
    $region4: #{tpu_custom_call.1} parent=1 // pred_region
      _
    $region5: #{tpu_custom_call.1} parent=1 // pred_fallthru
      _
    // Predicated region
    $region6: #{tpu_custom_call.1} parent=1 // pred_check
      _
    $region7: #{tpu_custom_call.1} parent=1 // pred_check_branch
      %17 = sbr.rel (0) target = $region9
    $region8: #{tpu_custom_call.1} parent=1 // pred_region
      %s18 = sld [smem:[#allocation5]]
      %p19 = scmp.lt.s32.totalorder 0, %s18
      %s20 = scalar_select %p19, 0, %s18
      %s21 = smul.u32 2, %s20
      %p22 = scmp.lt.s32.totalorder %s21, 1
      %s23 = scalar_select %p22, %s21, 1
      %s24 = smul.addr %s23, 2
      %s25 = scalar_lea.vmem %s4, %s24
      %s26 = sld [smem:[#allocation5]]
      %p27 = scmp.lt.s32.totalorder 0, %s26
      %s28 = scalar_select %p27, 0, %s26
      %s29 = smul.u32 2, %s28
    $region9: #{tpu_custom_call.1} parent=1 // pred_fallthru
      _
    %s30 = sld [smem:[#allocation5]]
    %p31 = scmp.lt.s32.totalorder 0, %s30
    %s32 = scalar_select %p31, 0, %s30
    %s33 = smul.u32 2, %s32
    %p34 = scmp.lt.s32.totalorder %s33, 1
    %s35 = scalar_select %p34, %s33, 1
    %s36 = smul.addr %s35, 2
    %s37 = scalar_lea.vmem %s4, %s36
    %s38 = sld [smem:[#allocation5]]
    %p39 = scmp.lt.s32.totalorder 0, %s38
    %s40 = scalar_select %p39, 0, %s38
    %s41 = smul.u32 2, %s40
    %p42 = scmp.lt.s32.totalorder %s41, 1
    %s43 = scalar_select %p42, %s41, 1
    %s44 = smul.addr %s43, 2
    %s45 = scalar_lea.vmem %s4, %s44
    %s46 = sld [smem:[#allocation5]]
    %p47 = scmp.lt.s32.totalorder 0, %s46
    %s48 = scalar_select %p47, 0, %s46
    %s49 = smul.u32 2, %s48
    %s50 = smul.u32 0, 8
    %s51 = sld [smem:[#allocation3]]
    %s52 = ssub.s32 %s51, %s50
    %s53 = sld [smem:[#allocation4]]
    %s54 = ssub.s32 %s53, %s50
    %p55 = scmp.le.s32.totalorder %s54, 0
    // Predicated region
    $region10: #{tpu_custom_call.1} parent=1 // pred_check
      %p56 = pneg %p55
    $region11: #{tpu_custom_call.1} parent=1 // pred_check_branch
      %58 = sbr.rel (%p56) target = $region13
    $region12: #{tpu_custom_call.1} parent=1 // pred_region
      %59 = vst [vmem:[#allocation6] sm:$0xf] 0.0
    $region13: #{tpu_custom_call.1} parent=1 // pred_fallthru
      _
    %p60 = scmp.ge.s32.totalorder %s52, 8
    // Predicated region
    $region14: #{tpu_custom_call.1} parent=1 // pred_check
      %p61 = pneg %p60
    $region15: #{tpu_custom_call.1} parent=1 // pred_check_branch
      %63 = sbr.rel (%p61) target = $region17
    $region16: #{tpu_custom_call.1} parent=1 // pred_region
      %v64 = vld [vmem:[%s45] sm:$0xf]
      %65 = vst [vmem:[#allocation6] sm:$0xf] %v64
    $region17: #{tpu_custom_call.1} parent=1 // pred_fallthru
      _
    %p66 = scmp.gt.s32.totalorder %s54, 0
    %p67 = scmp.lt.s32.totalorder %s52, 8
    %p68 = pnand %p66, %p67
    %p69 = pneg %p68
    // Predicated region
    $region18: #{tpu_custom_call.1} parent=1 // pred_check
      _
    $region19: #{tpu_custom_call.1} parent=1 // pred_check_branch
      %71 = sbr.rel (%p68) target = $region21
    $region20: #{tpu_custom_call.1} parent=1 // pred_region
      %v72 = vlaneseq
      %v73 = vand.u32 %v72, 127
      %v74 = vadd.s32 %v73, 128
      %v75 = vld [vmem:[%s3] sm:$0x3]
      %v76 = vstv %s50
      %v77 = vsub.s32 %v75, %v76
      %vm78 = vcmp.gt.s32.totalorder %v77, 0
      %v79 = vsel %vm78, %v77, 0
      %vm80 = vcmp.lt.s32.totalorder %v79, 8
      %v81 = vsel %vm80, %v79, 8
      %v82 = vmul.u32 %v81, 32
      %83 = vset.pattern.permute.xlu0 0
      %84 = vperm.xlu0 %83, %v82
      %v85 = vpop.permute.xlu0 %84
      %vm86 = vcmp.lt.s32.totalorder %v73, %v85
      %vm87 = vcmp.lt.s32.totalorder %v74, %v85
      %v88 = vld [vmem:[%s45] sm:$0xf]
      %v91 = vunpack.c.l.s4 1983009808
      %v92 = vunpack.c.0.s8 %v91
      %v93 = vlaneseq
      %v94 = vshrl.u32 %v93, 7
      %v95 = vsub.s32 %v92, %v94
      %v96 = vrot.slane %v88, %v95
      %v97 = vcombine.high %v96, %v96
      %v100 = vsel %vm86, %v96, 0.0
      %v101 = vsel %vm87, %v97, 0.0
      %v104 = vcombine.low %v100, %v101
      %v106 = vunpack.c.l.s4 1983009808
      %v107 = vunpack.c.0.s8 %v106
      %v108 = vlaneseq
      %v109 = vshrl.u32 %v108, 7
      %v110 = vsub.s32 %v107, %v109
      %v111 = vrot.slane %v104, %v110
      %113 = vst [vmem:[#allocation6] sm:$0xf] %v111
    $region21: #{tpu_custom_call.1} parent=1 // pred_fallthru
      _
    // Predicated region
    $region22: #{tpu_custom_call.1} parent=1 // pred_check
      _
    $region23: #{tpu_custom_call.1} parent=1 // pred_check_branch
      %115 = sbr.rel (0) target = $region25
    $region24: #{tpu_custom_call.1} parent=1 // pred_region
      %s117 = ssub.s32 64, 64
      %118 = vsyncadd [#allocation7], %s117
      %s120 = sshll.u32 [#allocation6], 4
      %s121 = int_to_ptr.vmem [resolvable:$true] %s120
      %123 = dma.vmem_to_hbm [thread:$0]  %s121, 64, %s5, [#allocation7]
    $region25: #{tpu_custom_call.1} parent=1 // pred_fallthru
      _
    // Predicated region
    $region26: #{tpu_custom_call.1} parent=1 // pred_check
      _
    $region27: #{tpu_custom_call.1} parent=1 // pred_check_branch
      %125 = sbr.rel (0) target = $region29
    $region28: #{tpu_custom_call.1} parent=1 // pred_region
      %126 = dma.done [#allocation7], 64
    $region29: #{tpu_custom_call.1} parent=1 // pred_fallthru
      _
    %127 = vsyncpa [#allocation7], 1

</llo_original>
